<compile_context>
chip_gen: v6e
topology: v6e:2x2x1
jax: 0.10.0
libtpu: 0.0.40
codegen_flags: <defaults>
</compile_context>

<pallas_src>
import jax
import jax.numpy as jnp
from jax.experimental import pallas as pl
from jax.experimental.pallas import tpu as pltpu


_LANE = 128
# Working-set budget (double-buffered input + f32 intermediates + output) kept
# well under the explicit 32 MiB scoped-VMEM limit, which is safe on every
# generation (v5e/v6e: 128 MiB physical, v7x: 64 MiB physical).
_VMEM_WORK_BYTES = 22 * 1024 * 1024
_VMEM_LIMIT_BYTES = 32 * 1024 * 1024
# Minimum number of total grid steps we aim for (megacore sharding on v7x plus
# real double-buffering needs >= 2; 8 keeps the pipeline saturated).
_MIN_TOTAL_STEPS = 8


def _round_up(x, m):
    return (x + m - 1) // m * m


def _salhead_kernel(x_ref, w_ref, b_ref, o_ref):
    # x_ref: (1, C, T)    current (batch, hw-tile) input block in VMEM
    # w_ref: (C, 1)       1x1 conv weight (out_channels = 1), constant block
    # b_ref: (1, 1)       bias, in SMEM
    # o_ref: (1, 1, 1, T) lane-dense output block
    #
    # TODO(synk): Dropout2d is identity at inference; training-mode channel
    # dropout (mask + 1/(1-p) scaling) is not implemented here.
    # TODO(synk): for bf16/fp8 inputs a chunked (per-sublane-group) cast would
    # avoid materializing a full-tile f32 copy; the VMEM budget below already
    # reserves room for it, so correctness/fit are unaffected.
    x = x_ref[0]                                  # (C, T) in input dtype
    w = w_ref[...]                                # (C, 1) f32, lane-broadcast
    b = b_ref[0, 0]                               # scalar from SMEM
    # 1x1 conv with a single output channel == per-lane dot over the channel
    # (sublane) axis: VPU multiply + sublane reduce, f32 accumulation.
    y = jnp.sum(x.astype(jnp.float32) * w, axis=0, keepdims=True) + b   # (1, T)
    o_ref[0, 0] = jax.nn.sigmoid(y).astype(o_ref.dtype)


def sal_head(x_nchw, weight, bias):
    """SalHead forward (eval mode): sigmoid(conv1x1(x)).

    x_nchw: (B, C, H, W), weight: (1, C, 1, 1), bias: (1,) -> (B, 1, H, W)
    """
    B, C, H, W = x_nchw.shape
    HW = H * W
    in_dtype = x_nchw.dtype
    out_dtype = x_nchw.dtype
    in_itemsize = jnp.dtype(in_dtype).itemsize
    out_itemsize = jnp.dtype(out_dtype).itemsize

    # --- lane-dense HW tile sizing ------------------------------------------
    # Per-lane-column VMEM cost of one grid step, using the *sublane-padded*
    # channel count (f32 -> 8, bf16 -> 16, int8 -> 32 sublanes per 32-bit row).
    sublane_pack_in = max(8, 32 // in_itemsize)
    col_in = _round_up(C, sublane_pack_in) * in_itemsize   # input block bytes/col
    col_f32 = _round_up(C, 8) * 4                          # f32 cast/product temps
    col_out = 8 * out_itemsize                             # 1-row out block padded to 8 sublanes
    per_col = 2 * col_in + 2 * col_f32 + 2 * col_out       # 2x = double-buffered

    budget_tile = max(_LANE, (_VMEM_WORK_BYTES // per_col) // _LANE * _LANE)
    hw_tile = min(budget_tile, _round_up(HW, _LANE))

    # Ensure enough grid steps for both TensorCores (v7x) and for pipelining.
    if B * pl.cdiv(HW, hw_tile) < _MIN_TOTAL_STEPS:
        splits = pl.cdiv(_MIN_TOTAL_STEPS, B)
        hw_tile = min(hw_tile, max(_LANE, _round_up(pl.cdiv(HW, splits), _LANE)))

    n_hw_tiles = pl.cdiv(HW, hw_tile)

    # No host-side padding: the ragged edge block reads (and writes to the
    # padded output slab) a few junk lanes that are cropped below.
    x_flat = x_nchw.reshape(B, C, HW)
    w_col = weight.reshape(C, 1).astype(jnp.float32)
    b_smem = bias.reshape(1, 1).astype(jnp.float32)

    cost = pl.CostEstimate(
        flops=2 * B * C * HW,
        transcendentals=B * HW,
        bytes_accessed=(B * C * HW * in_itemsize
                        + B * HW * out_itemsize
                        + 4 * C + 4),
    )

    out4 = pl.pallas_call(
        _salhead_kernel,
        out_shape=jax.ShapeDtypeStruct((B, n_hw_tiles, 1, hw_tile), out_dtype),
        grid_spec=pltpu.PrefetchScalarGridSpec(
            num_scalar_prefetch=0,
            grid=(B, n_hw_tiles),
            in_specs=[
                pl.BlockSpec((1, C, hw_tile), lambda b, h: (b, 0, h)),
                pl.BlockSpec((C, 1), lambda b, h: (0, 0)),
                pl.BlockSpec(memory_space=pltpu.MemorySpace.SMEM),
            ],
            out_specs=pl.BlockSpec((1, 1, 1, hw_tile), lambda b, h: (b, h, 0, 0)),
        ),
        compiler_params=pltpu.CompilerParams(
            dimension_semantics=("parallel", "parallel"),
            vmem_limit_bytes=_VMEM_LIMIT_BYTES,
        ),
        cost_estimate=cost,
    )(x_flat, w_col, b_smem)

    out = out4.reshape(B, n_hw_tiles * hw_tile)
    if n_hw_tiles * hw_tile != HW:
        out = out[:, :HW]
    return out.reshape(B, 1, H, W)


if __name__ == "__main__":
    key = jax.random.PRNGKey(0)
    kx, kw, kb = jax.random.split(key, 3)

    B, C, H, W = 2, 4, 16, 16  # in_channel = 4
    x = jax.random.normal(kx, (B, C, H, W), dtype=jnp.float32)

    # Deterministic synthetic parameters for Conv2d(C, 1, kernel_size=1).
    weight = jax.random.normal(kw, (1, C, 1, 1), dtype=jnp.float32) * 0.1
    bias = jax.random.normal(kb, (1,), dtype=jnp.float32) * 0.1

    out = sal_head(x, weight, bias)
    out = jax.block_until_ready(out)

    # Reference check in plain JAX (1x1 conv == einsum over channels).
    ref = jax.nn.sigmoid(
        jnp.einsum("bchw,c->bhw", x, weight.reshape(C)) + bias[0]
    )[:, None, :, :]
    assert out.shape == (B, 1, H, W)
    assert jnp.allclose(out, ref, atol=1e-5, rtol=1e-5)

    print("KERNEL_OK")
</pallas_src>

<mosaic_0001>
module attributes {stable_mosaic.version = 11 : i64} {
  func.func @_salhead_kernel(%arg0: i32, %arg1: i32, %arg2: memref<1x4x128xf32, #tpu.memory_space<vmem>>, %arg3: memref<4x1xf32, #tpu.memory_space<vmem>>, %arg4: memref<1x1xf32, #tpu.memory_space<smem>>, %arg5: memref<1x1x1x128xf32, #tpu.memory_space<vmem>>) attributes {dimension_semantics = [#tpu.dimension_semantics<parallel>, #tpu.dimension_semantics<parallel>], iteration_bounds = array<i64: 2, 2>, scalar_prefetch = 0 : i64, scratch_operands = 0 : i64, tpu.core_type = #tpu.core_type<tc>, window_params = [{transform_indices = @transform_0, window_bounds = array<i64: 1, 4, 128>}, {pipeline_mode = #tpu.pipeline_mode<synchronous>, transform_indices = @transform_1, window_bounds = array<i64: 4, 1>}, {transform_indices = @transform_2, window_bounds = array<i64: 1, 1>}, {transform_indices = @transform_3, window_bounds = array<i64: 1, 1, 1, 128>}]} {
    %c0 = arith.constant 0 : index
    %c0_0 = arith.constant 0 : index
    %c0_1 = arith.constant 0 : index
    %0 = vector.load %arg2[%c0, %c0_0, %c0_1] : memref<1x4x128xf32, #tpu.memory_space<vmem>>, vector<1x4x128xf32>
    %1 = vector.shape_cast %0 : vector<1x4x128xf32> to vector<4x128xf32>
    %c0_2 = arith.constant 0 : index
    %c0_3 = arith.constant 0 : index
    %2 = vector.load %arg3[%c0_2, %c0_3] : memref<4x1xf32, #tpu.memory_space<vmem>>, vector<4x1xf32>
    %c0_4 = arith.constant 0 : index
    %c0_5 = arith.constant 0 : index
    %3 = memref.load %arg4[%c0_4, %c0_5] : memref<1x1xf32, #tpu.memory_space<smem>>
    %4 = vector.broadcast %2 : vector<4x1xf32> to vector<4x128xf32>
    %5 = arith.mulf %1, %4 : vector<4x128xf32>
    %cst = arith.constant dense<0.000000e+00> : vector<128xf32>
    %6 = vector.multi_reduction <add>, %5, %cst [0] : vector<4x128xf32> to vector<128xf32>
    %7 = vector.shape_cast %6 : vector<128xf32> to vector<1x128xf32>
    %8 = vector.broadcast %3 : f32 to vector<1x128xf32>
    %9 = arith.addf %7, %8 : vector<1x128xf32>
    %10 = arith.negf %9 : vector<1x128xf32>
    %11 = math.exp %10 : vector<1x128xf32>
    %cst_6 = arith.constant 1.000000e+00 : f32
    %12 = vector.broadcast %cst_6 : f32 to vector<1x128xf32>
    %13 = arith.addf %12, %11 : vector<1x128xf32>
    %14 = arith.divf %12, %13 : vector<1x128xf32>
    %c0_7 = arith.constant 0 : index
    %c0_8 = arith.constant 0 : index
    %c0_9 = arith.constant 0 : index
    %c0_10 = arith.constant 0 : index
    %15 = vector.load %arg5[%c0_7, %c0_8, %c0_9, %c0_10] : memref<1x1x1x128xf32, #tpu.memory_space<vmem>>, vector<1x1x1x128xf32>
    %16 = vector.shape_cast %15 : vector<1x1x1x128xf32> to vector<1x128xf32>
    %17 = vector.shape_cast %14 : vector<1x128xf32> to vector<1x1x1x128xf32>
    tpu.vector_store %arg5[%c0_7, %c0_8, %c0_9, %c0_10], %17 {strides = array<i32>} : memref<1x1x1x128xf32, #tpu.memory_space<vmem>>, vector<1x1x1x128xf32>,
    return
  }
  func.func @transform_0(%arg0: i32, %arg1: i32) -> (i32, i32, i32) {
    %c0_i32 = arith.constant 0 : i32
    %c0_i32_0 = arith.constant 0 : i32
    return %arg0, %c0_i32, %arg1 : i32, i32, i32
  }
  func.func @transform_1(%arg0: i32, %arg1: i32) -> (i32, i32) {
    %c0_i32 = arith.constant 0 : i32
    %c0_i32_0 = arith.constant 0 : i32
    %c0_i32_1 = arith.constant 0 : i32
    return %c0_i32, %c0_i32_0 : i32, i32
  }
  func.func @transform_2(%arg0: i32, %arg1: i32) -> (i32, i32) {
    %c0_i32 = arith.constant 0 : i32
    %c0_i32_0 = arith.constant 0 : i32
    %c0_i32_1 = arith.constant 0 : i32
    return %c0_i32, %c0_i32_0 : i32, i32
  }
  func.func @transform_3(%arg0: i32, %arg1: i32) -> (i32, i32, i32, i32) {
    %c0_i32 = arith.constant 0 : i32
    %c0_i32_0 = arith.constant 0 : i32
    %c0_i32_1 = arith.constant 0 : i32
    return %arg0, %arg1, %c0_i32, %c0_i32_0 : i32, i32, i32, i32
  }
}

</mosaic_0001>

<llo_original>
// kernel: tpu_custom_call.1
$region0: #{tpu_custom_call.1}
  #allocation0 [shape = 'u32[]', space=smem, size = 0x4, offset = 0x4, fixed_abs, tag = 'smem constant byte address 0x4 - core index']
  #allocation1 [shape = 'u32[144,128]{1,0:T(1,128)}', space=vmem, size = 0x12000, scoped, tag = 'internal scratch']
  #allocation2 [shape = 'f32[1,1]{1,0:T(1,128)S(6)}', space=smem, size = 0x200, scoped, tag = 'scoped memory for tpu_custom_call.1']
  %s0 = inlined_call_operand.hbm [shape: f32[2,4,256], index: 0, kind: input, shape index: {}]
  %s1 = inlined_call_operand.vmem [shape: f32[4,1], index: 1, kind: input, shape index: {}]
  %s2 = inlined_call_operand.<no memory space> [shape: f32[1,1], index: 2, kind: input, shape index: {}]
  %s3 = inlined_call_operand.hbm [shape: f32[2,2,1,128], index: 3, kind: output, shape index: {}]
  %s4 = sld [smem:[#allocation0]]
  $region49: #{tpu_custom_call.1} parent=0
    _
  %s6 = ssub.s32 1, %s4
  %s7 = scalar_select 0, %s6, %s4
  %8 = sst [smem:[#allocation2]] %s2
  $region1: #{tpu_custom_call.1} parent=0
    #allocation3 [shape = 'u8[4096]{0}', space=vmem, size = 0x1000, scoped, tag = 'input window, operand 0']
    #allocation4 [shape = 's32[2]{0}', space=sflag, size = 0x8, scoped, tag = 'scoped memory for tpu_custom_call.1']
    #allocation5 [shape = 's32[2]{0}', space=sflag, size = 0x8, scoped, tag = 'scoped memory for tpu_custom_call.1']
    #allocation6 [shape = 'u8[1024]{0}', space=vmem, size = 0x400, scoped, tag = 'output window, operand 0']
    %9 = vsyncpa [#allocation4], 0
    %s10 = scalar_lea.sflag [#allocation4], 1
    %11 = vsyncpa %s10, 0
    %12 = vsyncpa [#allocation5], 0
    %s13 = scalar_lea.sflag [#allocation5], 1
    %14 = vsyncpa %s13, 0
    loop: start=0, step=1, limit=6
    $region2: #{tpu_custom_call.1} parent=1 // loop_pre_header
      _
    $region3: #{tpu_custom_call.1} parent=1 // loop_header
      %s16 = sphi 0, %s20
      %p17 = scmp.ge.s32.totalorder %s16, 6
      %s23 = sphi 0, %s35
      %s24 = sphi 0, %s31
      %s25 = sphi 0, %s23
      %s26 = sphi 0, %s24
      %s27 = sphi 0, %s25
      %s28 = sphi 0, %s26
      %s40 = sphi 0, %s42
      %s43 = sphi 0, %s40
      %s44 = sphi 0, %s43
      %s60 = sphi 0, %s44
      %s64 = sphi 0, %s64
      %s66 = sphi 0, %s64
      %s67 = sphi 0, %s66
      %s81 = sphi 0, %s67
      %s85 = sphi 0, %s85
      %s87 = sphi 0, %s85
      %s88 = sphi 0, %s87
      %s102 = sphi 0, %s88
      %s110 = sphi 0, %s112
      %s113 = sphi 0, %s110
      %s114 = sphi 0, %s113
      %s130 = sphi 0, %s114
    $region4: #{tpu_custom_call.1} parent=1 // loop_header_branch
      %19 = sbr.rel (%p17) target = $region8
    $region5: #{tpu_custom_call.1} parent=1 // loop_body
      %s21 = ssub.s32 %s16, 1
      %s22 = ssub.s32 %s16, 2
      %s29 = sadd.s32 1, %s24
      %p30 = scmp.ge.s32.totalorder %s29, 2
      %s31 = scalar_select %p30, 0, %s29
      %s32 = sadd.s32 1, %s23
      %s33 = scalar_select %p30, %s32, %s23
      %p34 = scmp.ge.s32.totalorder %s33, 2
      %s35 = scalar_select %p34, 0, %s33
      %s36 = ssub.s32 %s23, %s35
      %s37 = ssub.s32 %s24, %s31
      %s38 = sor.u32 %s36, %s37
      %p39 = scmp.eq.s32.totalorder %s38, 0
      %s41 = sadd.s32 %s40, 1
      %s42 = scalar_select %p39, %s40, %s41
      %p45 = pneg %p39
      %p46 = scmp.eq.s32.totalorder %s16, 3
      %p47 = por %p45, %p46
      %p48 = scmp.ne.s32.totalorder %s40, %s43
      %p49 = scmp.eq.s32.totalorder %s16, 0
      %p50 = por %p48, %p49
      %p51 = scmp.ne.s32.totalorder %s40, %s43
      %p52 = scmp.eq.s32.totalorder %s21, 3
      %p53 = por %p51, %p52
      %p54 = scmp.ne.s32.totalorder %s43, %s44
      %p55 = scmp.eq.s32.totalorder %s21, 0
      %p56 = por %p54, %p55
      %p57 = scmp.ne.s32.totalorder %s43, %s44
      %p58 = scmp.eq.s32.totalorder %s22, 3
      %p59 = por %p57, %p58
      %p61 = scmp.ne.s32.totalorder %s44, %s60
      %p62 = scmp.eq.s32.totalorder %s22, 0
      %p63 = por %p61, %p62
      %s65 = sadd.s32 %s64, 1
      %p68 = scmp.eq.s32.totalorder %s16, 3
      %p69 = scmp.ne.s32.totalorder %s64, %s66
      %p70 = scmp.eq.s32.totalorder %s16, 0
      %p71 = por %p69, %p70
      %p72 = scmp.ne.s32.totalorder %s64, %s66
      %p73 = scmp.eq.s32.totalorder %s21, 3
      %p74 = por %p72, %p73
      %p75 = scmp.ne.s32.totalorder %s66, %s67
      %p76 = scmp.eq.s32.totalorder %s21, 0
      %p77 = por %p75, %p76
      %p78 = scmp.ne.s32.totalorder %s66, %s67
      %p79 = scmp.eq.s32.totalorder %s22, 3
      %p80 = por %p78, %p79
      %p82 = scmp.ne.s32.totalorder %s67, %s81
      %p83 = scmp.eq.s32.totalorder %s22, 0
      %p84 = por %p82, %p83
      %s86 = sadd.s32 %s85, 1
      %p89 = scmp.eq.s32.totalorder %s16, 3
      %p90 = scmp.ne.s32.totalorder %s85, %s87
      %p91 = scmp.eq.s32.totalorder %s16, 0
      %p92 = por %p90, %p91
      %p93 = scmp.ne.s32.totalorder %s85, %s87
      %p94 = scmp.eq.s32.totalorder %s21, 3
      %p95 = por %p93, %p94
      %p96 = scmp.ne.s32.totalorder %s87, %s88
      %p97 = scmp.eq.s32.totalorder %s21, 0
      %p98 = por %p96, %p97
      %p99 = scmp.ne.s32.totalorder %s87, %s88
      %p100 = scmp.eq.s32.totalorder %s22, 3
      %p101 = por %p99, %p100
      %p103 = scmp.ne.s32.totalorder %s88, %s102
      %p104 = scmp.eq.s32.totalorder %s22, 0
      %p105 = por %p103, %p104
      %s106 = ssub.s32 %s23, %s35
      %s107 = ssub.s32 %s24, %s31
      %s108 = sor.u32 %s106, %s107
      %p109 = scmp.eq.s32.totalorder %s108, 0
      %s111 = sadd.s32 %s110, 1
      %s112 = scalar_select %p109, %s110, %s111
      %p115 = pneg %p109
      %p116 = scmp.eq.s32.totalorder %s16, 3
      %p117 = por %p115, %p116
      %p118 = scmp.ne.s32.totalorder %s110, %s113
      %p119 = scmp.eq.s32.totalorder %s16, 0
      %p120 = por %p118, %p119
      %p121 = scmp.ne.s32.totalorder %s110, %s113
      %p122 = scmp.eq.s32.totalorder %s21, 3
      %p123 = por %p121, %p122
      %p124 = scmp.ne.s32.totalorder %s113, %s114
      %p125 = scmp.eq.s32.totalorder %s21, 0
      %p126 = por %p124, %p125
      %p127 = scmp.ne.s32.totalorder %s113, %s114
      %p128 = scmp.eq.s32.totalorder %s22, 3
      %p129 = por %p127, %p128
      %p131 = scmp.ne.s32.totalorder %s114, %s130
      %p132 = scmp.eq.s32.totalorder %s22, 0
      %p133 = por %p131, %p132
      %p134 = scmp.le.s32.totalorder 1, %s16
      %p135 = scmp.lt.s32.totalorder %s16, 5
      %p136 = pnand %p134, %p135
      %p137 = pneg %p136
      // Predicated region
      $region9: #{tpu_custom_call.1} parent=5 // pred_check
        _
      $region10: #{tpu_custom_call.1} parent=5 // pred_check_branch
        %139 = sbr.rel (%p136) target = $region12
      $region11: #{tpu_custom_call.1} parent=5 // pred_region
        %s140 = ssub.s32 %s16, 1
        // Predicated region
        $region13: #{tpu_custom_call.1} parent=11 // pred_check
          %p141 = pneg %p77
        $region14: #{tpu_custom_call.1} parent=11 // pred_check_branch
          %143 = sbr.rel (%p141) target = $region16
        $region15: #{tpu_custom_call.1} parent=11 // pred_region
          _
        $region16: #{tpu_custom_call.1} parent=11 // pred_fallthru
          _
        // Predicated region
        $region17: #{tpu_custom_call.1} parent=11 // pred_check
          %p144 = pneg %p98
        $region18: #{tpu_custom_call.1} parent=11 // pred_check_branch
          %146 = sbr.rel (%p144) target = $region20
        $region19: #{tpu_custom_call.1} parent=11 // pred_region
          _
        $region20: #{tpu_custom_call.1} parent=11 // pred_fallthru
          _
      $region12: #{tpu_custom_call.1} parent=5 // pred_fallthru
        _
      %p147 = scmp.lt.s32.totalorder %s16, 4
      // Predicated region
      $region21: #{tpu_custom_call.1} parent=5 // pred_check
        %p148 = pneg %p147
      $region22: #{tpu_custom_call.1} parent=5 // pred_check_branch
        %150 = sbr.rel (%p148) target = $region24
      $region23: #{tpu_custom_call.1} parent=5 // pred_region
        // Predicated region
        $region25: #{tpu_custom_call.1} parent=23 // pred_check
          %p151 = pneg %p50
        $region26: #{tpu_custom_call.1} parent=23 // pred_check_branch
          %153 = sbr.rel (%p151) target = $region28
        $region27: #{tpu_custom_call.1} parent=23 // pred_region
          %s154 = sand.u32 %s40, 1
          %s155 = scalar_lea.sflag [#allocation4], %s154
          %s156 = sand.u32 %s40, 1
          %s157 = smul.addr %s156, 4
          %s158 = scalar_lea.vmem [#allocation3], %s157
          %s160 = ssub.s32 64, 64
          %161 = vsyncadd %s155, %s160
          %s162 = smul.addr %s23, 2
          %s163 = sadd.s32 %s24, %s162
          %s164 = smul.addr %s163, 64
          %s165 = scalar_lea.hbm %s0, %s164
          %s167 = sshll.u32 %s158, 4
          %s168 = int_to_ptr.vmem [resolvable:$true] %s167
          %170 = dma.hbm_to_vmem [thread:$0]  %s165, 64, %s168, %s155
        $region28: #{tpu_custom_call.1} parent=23 // pred_fallthru
          _
      $region24: #{tpu_custom_call.1} parent=5 // pred_fallthru
        _
      %p171 = scmp.le.s32.totalorder 1, %s16
      %p172 = scmp.lt.s32.totalorder %s16, 5
      %p173 = pnand %p171, %p172
      %p174 = pneg %p173
      // Predicated region
      $region29: #{tpu_custom_call.1} parent=5 // pred_check
        _
      $region30: #{tpu_custom_call.1} parent=5 // pred_check_branch
        %176 = sbr.rel (%p173) target = $region32
      $region31: #{tpu_custom_call.1} parent=5 // pred_region
        %s177 = ssub.s32 %s16, 1
        %s178 = sand.u32 %s43, 1
        %s179 = scalar_lea.sflag [#allocation4], %s178
        %s180 = sand.u32 %s43, 1
        %s181 = smul.addr %s180, 4
        %s182 = scalar_lea.vmem [#allocation3], %s181
        // Predicated region
        $region33: #{tpu_custom_call.1} parent=31 // pred_check
          %p183 = pneg %p56
        $region34: #{tpu_custom_call.1} parent=31 // pred_check_branch
          %185 = sbr.rel (%p183) target = $region36
        $region35: #{tpu_custom_call.1} parent=31 // pred_region
          %186 = dma.done %s179, 64
        $region36: #{tpu_custom_call.1} parent=31 // pred_fallthru
          _
        %s187 = sand.u32 %s43, 1
        %s188 = scalar_lea.sflag [#allocation4], %s187
        %s189 = sand.u32 %s43, 1
        %s190 = smul.addr %s189, 4
        %s191 = scalar_lea.vmem [#allocation3], %s190
        %p192 = pneg %p56
        %p193 = pneg %p53
        %p194 = pneg %p77
        %p195 = pneg %p74
        %p196 = pneg %p98
        %p197 = pneg %p95
        %p198 = pneg %p126
        %p199 = pneg %p123
        %s200 = sand.u32 %s113, 1
        %s201 = scalar_lea.sflag [#allocation5], %s200
        %s202 = sand.u32 %s113, 1
        %s203 = scalar_lea.vmem [#allocation6], %s202
        %v204 = vld [vmem:[%s182] sm:$0xf]
        %v205 = vld [vmem:[%s1] sm:$0xf]
        %s206 = sld [smem:[#allocation2]]
        %208 = vset.pattern.permute.xlu0 0
        %209 = vperm.xlu0 %208, %v205
        %v210 = vpop.permute.xlu0 %209
        %v212 = vmul.f32 %v204, %v210
        %vm213 = vcmask 1043456
        %v214 = vsel %vm213, %v212, 0.0
        %v215 = vrot.slane %v214, 4
        %v216 = vadd.f32 %v214, %v215
        %v217 = vrot.slane %v216, 2
        %v218 = vadd.f32 %v216, %v217
        %v219 = vrot.slane %v218, 1
        %v220 = vadd.f32 %v218, %v219
        %v221 = vstv %s206
        %v222 = vadd.f32 %v220, %v221
        %v223 = vxor.u32 %v222, 2147483648
        %v224 = vmul.f32 %v223, 1.442695
        %v225 = vpow.pop %v224
        %v226 = vadd.f32 %v225, 1.0
        %v227 = vrcp.pop %v226
        %v228 = vmul.f32 1.0, %v227
        %229 = vst [vmem:[%s203] sm:$0x1] %v228
        %s230 = sand.u32 %s113, 1
        %s231 = scalar_lea.sflag [#allocation5], %s230
        %s232 = sand.u32 %s113, 1
        %s233 = scalar_lea.vmem [#allocation6], %s232
        // Predicated region
        $region37: #{tpu_custom_call.1} parent=31 // pred_check
          %p234 = pneg %p123
        $region38: #{tpu_custom_call.1} parent=31 // pred_check_branch
          %236 = sbr.rel (%p234) target = $region40
        $region39: #{tpu_custom_call.1} parent=31 // pred_region
          %s238 = ssub.s32 16, 16
          %239 = vsyncadd %s231, %s238
          %s240 = smul.addr %s25, 2
          %s241 = sadd.s32 %s26, %s240
          %s242 = smul.addr %s241, 16
          %s243 = scalar_lea.hbm %s3, %s242
          %s245 = sshll.u32 %s233, 4
          %s246 = int_to_ptr.vmem [resolvable:$true] %s245
          %248 = dma.vmem_to_hbm [thread:$0]  %s246, 16, %s243, %s231
        $region40: #{tpu_custom_call.1} parent=31 // pred_fallthru
          _
      $region32: #{tpu_custom_call.1} parent=5 // pred_fallthru
        _
      %p249 = scmp.le.s32.totalorder 2, %s16
      // Predicated region
      $region41: #{tpu_custom_call.1} parent=5 // pred_check
        %p250 = pneg %p249
      $region42: #{tpu_custom_call.1} parent=5 // pred_check_branch
        %252 = sbr.rel (%p250) target = $region44
      $region43: #{tpu_custom_call.1} parent=5 // pred_region
        %s253 = ssub.s32 %s16, 2
        // Predicated region
        $region45: #{tpu_custom_call.1} parent=43 // pred_check
          %p254 = pneg %p129
        $region46: #{tpu_custom_call.1} parent=43 // pred_check_branch
          %256 = sbr.rel (%p254) target = $region48
        $region47: #{tpu_custom_call.1} parent=43 // pred_region
          %s257 = sand.u32 %s114, 1
          %s258 = scalar_lea.sflag [#allocation5], %s257
          %s259 = sand.u32 %s114, 1
          %s260 = scalar_lea.vmem [#allocation6], %s259
          %261 = dma.done %s258, 16
        $region48: #{tpu_custom_call.1} parent=43 // pred_fallthru
          _
      $region44: #{tpu_custom_call.1} parent=5 // pred_fallthru
        _
    $region6: #{tpu_custom_call.1} parent=1 // loop_footer
      %s20 = sadd.s32 1, %s16
    $region7: #{tpu_custom_call.1} parent=1 // loop_footer_branch
      %15 = sbr.rel target = $region3
    $region8: #{tpu_custom_call.1} parent=1 // loop_exit
      _
    %262 = vsyncpa [#allocation4], 1
    %s263 = scalar_lea.sflag [#allocation4], 1
    %264 = vsyncpa %s263, 1
    %265 = vsyncpa [#allocation5], 1
    %s266 = scalar_lea.sflag [#allocation5], 1
    %267 = vsyncpa %s266, 1

</llo_original>
